<compile_context>
chip_gen: v5e
topology: v5e:2x2
jax: 0.10.0
libtpu: 0.0.40
codegen_flags: <defaults>
</compile_context>

<pallas_src>
import functools

import jax
import jax.numpy as jnp
from jax.experimental import pallas as pl
from jax.experimental.pallas import tpu as pltpu


def _quantizer_kernel(x_ref, we_ref, be_ref, wd_ref, bd_ref, g_ref, beta_ref,
                      xo_ref, zt_ref, *, scale, eps):
    # ---- encode: Linear(E -> Q) + Tanh, scale, straight-through floor ----
    x = x_ref[...]                                            # (TN, E) f32
    y = jnp.dot(x, we_ref[...], preferred_element_type=jnp.float32) + be_ref[...]
    z = jnp.floor(scale * jnp.tanh(y))                        # (TN, Q)
    # lane-dense store: (Q, TN) so the 128-lane axis is the row tile, not Q=4
    zt_ref[...] = z.T.astype(zt_ref.dtype)

    # ---- decode: Linear(Q -> E) + LeakyReLU(0.01) + LayerNorm(E) ----
    # TODO(synk): K=Q=4 decode matmul is <5% MXU utilization; could be folded
    # into VPU broadcast-FMAs, kept as jnp.dot for robustness (mem-bound anyway).
    h = jnp.dot(z, wd_ref[...], preferred_element_type=jnp.float32) + bd_ref[...]
    h = jnp.where(h >= 0, h, 0.01 * h)                        # LeakyReLU(0.01)
    mean = jnp.mean(h, axis=-1, keepdims=True)
    cent = h - mean
    var = jnp.mean(cent * cent, axis=-1, keepdims=True)
    hn = cent * jax.lax.rsqrt(var + eps)
    xo_ref[...] = (hn * g_ref[...] + beta_ref[...]).astype(xo_ref.dtype)


def _pick_tile_n(n_rows, e_dim, q_dim, vmem_budget_bytes=8 << 20):
    """Largest row tile whose double-buffered I/O fits a conservative VMEM
    budget (safe on v5e's 16 MiB scoped default and v7x's 64 MiB VMEM)."""
    if n_rows <= 512:
        # Single block; block dims == full array dims (always layout-legal).
        return n_rows
    lane = lambda d: -(-d // 128) * 128       # lane (last-dim) padding
    sub = lambda d: -(-d // 8) * 8            # sublane padding
    # Per-row f32 VMEM bytes, double buffered: x in, x_dec out, z^T out.
    per_row = 2 * 4 * (2 * lane(e_dim) + sub(q_dim))
    tile = (vmem_budget_bytes // per_row) // 512 * 512
    return int(max(512, min(2048, tile)))     # multiple of 512 -> %8 and %128 OK


def quantizer_forward(x, params, *, scale, eps=1e-5):
    """x: (B, T, E) float32. Returns (x_dec (B, T, E), z (B, T, Q))."""
    B, T, E = x.shape
    Q = params["w_enc"].shape[1]
    N = B * T
    x2d = x.reshape(N, E)

    tile_n = _pick_tile_n(N, E, Q)
    grid = (pl.cdiv(N, tile_n),)

    kernel = functools.partial(_quantizer_kernel, scale=scale, eps=eps)

    const = lambda i: (0, 0)                           # resident params
    in_specs = [
        pl.BlockSpec((tile_n, E), lambda i: (i, 0)),   # x rows, streamed
        pl.BlockSpec((E, Q), const),                   # w_enc
        pl.BlockSpec((1, Q), const),                   # b_enc
        pl.BlockSpec((Q, E), const),                   # w_dec
        pl.BlockSpec((1, E), const),                   # b_dec
        pl.BlockSpec((1, E), const),                   # gamma
        pl.BlockSpec((1, E), const),                   # beta
    ]
    out_specs = (
        pl.BlockSpec((tile_n, E), lambda i: (i, 0)),   # x_dec rows
        pl.BlockSpec((Q, tile_n), lambda i: (0, i)),   # z^T, lane-dense
    )

    # Advisory cost estimate for XLA scheduling (kernel is HBM-bandwidth bound).
    param_bytes = 4 * (E * Q + Q + Q * E + 3 * E)
    cost = pl.CostEstimate(
        flops=4 * N * E * Q,                 # two (N,E)x(E,Q)-sized matmuls
        transcendentals=N * Q,               # tanh
        bytes_accessed=4 * (2 * N * E + N * Q) + param_bytes,
    )

    x_dec2d, z_t = pl.pallas_call(
        kernel,
        out_shape=(
            jax.ShapeDtypeStruct((N, E), jnp.float32),
            jax.ShapeDtypeStruct((Q, N), jnp.float32),
        ),
        grid=grid,
        in_specs=in_specs,
        out_specs=out_specs,
        compiler_params=pltpu.CompilerParams(
            dimension_semantics=("parallel",),
            vmem_limit_bytes=32 * 1024 * 1024,
        ),
        cost_estimate=cost,
    )(
        x2d,
        params["w_enc"],   # (E, Q)  == torch Linear weight.T
        params["b_enc"],   # (1, Q)
        params["w_dec"],   # (Q, E)
        params["b_dec"],   # (1, E)
        params["gamma"],   # (1, E)  LayerNorm weight
        params["beta"],    # (1, E)  LayerNorm bias
    )
    return x_dec2d.reshape(B, T, E), z_t.T.reshape(B, T, Q)


def _reference_forward(x, params, *, scale, eps=1e-5):
    y = jnp.tanh(x @ params["w_enc"] + params["b_enc"][0]) * scale
    z = jnp.floor(y)                                   # forward value of the STE
    h = z @ params["w_dec"] + params["b_dec"][0]
    h = jnp.where(h >= 0, h, 0.01 * h)
    mean = jnp.mean(h, axis=-1, keepdims=True)
    var = jnp.mean((h - mean) ** 2, axis=-1, keepdims=True)
    hn = (h - mean) * jax.lax.rsqrt(var + eps)
    return hn * params["gamma"][0] + params["beta"][0], z


if __name__ == "__main__":
    # Small, module-consistent shapes.
    B, T = 2, 8            # batch, sequence
    E = 32                 # embedding_dimension
    Q = 4                  # quantizer_dimension
    BITS = 5               # quantizer_bits
    scale = float(2 ** BITS // 2)   # 16.0

    key = jax.random.PRNGKey(0)
    k_x, k_we, k_be, k_wd, k_bd, k_g, k_b = jax.random.split(key, 7)

    x = jax.random.normal(k_x, (B, T, E), dtype=jnp.float32)

    # Deterministic synthetic parameters (shapes match nn.Linear / nn.LayerNorm).
    params = {
        "w_enc": jax.random.normal(k_we, (E, Q), dtype=jnp.float32) * 0.2,
        "b_enc": jax.random.normal(k_be, (1, Q), dtype=jnp.float32) * 0.1,
        "w_dec": jax.random.normal(k_wd, (Q, E), dtype=jnp.float32) * 0.2,
        "b_dec": jax.random.normal(k_bd, (1, E), dtype=jnp.float32) * 0.1,
        "gamma": 1.0 + 0.05 * jax.random.normal(k_g, (1, E), dtype=jnp.float32),
        "beta": 0.05 * jax.random.normal(k_b, (1, E), dtype=jnp.float32),
    }

    x_dec, z = quantizer_forward(x, params, scale=scale)
    jax.block_until_ready((x_dec, z))

    x_ref, z_ref = _reference_forward(x, params, scale=scale)
    assert x_dec.shape == (B, T, E) and z.shape == (B, T, Q)
    assert jnp.allclose(x_dec, x_ref, atol=1e-4, rtol=1e-4)
    assert jnp.allclose(z, z_ref, atol=1e-4, rtol=1e-4)

    print("KERNEL_OK")
</pallas_src>

<mosaic_0001>
module attributes {stable_mosaic.version = 11 : i64} {
  func.func @_quantizer_kernel(%arg0: i32, %arg1: memref<16x32xf32, #tpu.memory_space<vmem>>, %arg2: memref<32x4xf32, #tpu.memory_space<vmem>>, %arg3: memref<1x4xf32, #tpu.memory_space<vmem>>, %arg4: memref<4x32xf32, #tpu.memory_space<vmem>>, %arg5: memref<1x32xf32, #tpu.memory_space<vmem>>, %arg6: memref<1x32xf32, #tpu.memory_space<vmem>>, %arg7: memref<1x32xf32, #tpu.memory_space<vmem>>, %arg8: memref<16x32xf32, #tpu.memory_space<vmem>>, %arg9: memref<4x16xf32, #tpu.memory_space<vmem>>) attributes {dimension_semantics = [#tpu.dimension_semantics<parallel>], iteration_bounds = array<i64: 1>, scalar_prefetch = 0 : i64, scratch_operands = 0 : i64, tpu.core_type = #tpu.core_type<tc>, window_params = [{transform_indices = @transform_0, window_bounds = array<i64: 16, 32>}, {pipeline_mode = #tpu.pipeline_mode<synchronous>, transform_indices = @transform_1, window_bounds = array<i64: 32, 4>}, {pipeline_mode = #tpu.pipeline_mode<synchronous>, transform_indices = @transform_2, window_bounds = array<i64: 1, 4>}, {pipeline_mode = #tpu.pipeline_mode<synchronous>, transform_indices = @transform_3, window_bounds = array<i64: 4, 32>}, {pipeline_mode = #tpu.pipeline_mode<synchronous>, transform_indices = @transform_4, window_bounds = array<i64: 1, 32>}, {pipeline_mode = #tpu.pipeline_mode<synchronous>, transform_indices = @transform_5, window_bounds = array<i64: 1, 32>}, {pipeline_mode = #tpu.pipeline_mode<synchronous>, transform_indices = @transform_6, window_bounds = array<i64: 1, 32>}, {transform_indices = @transform_7, window_bounds = array<i64: 16, 32>}, {transform_indices = @transform_8, window_bounds = array<i64: 4, 16>}]} {
    %c0 = arith.constant 0 : index
    %c0_0 = arith.constant 0 : index
    %0 = vector.load %arg1[%c0, %c0_0] : memref<16x32xf32, #tpu.memory_space<vmem>>, vector<16x32xf32>
    %c0_1 = arith.constant 0 : index
    %c0_2 = arith.constant 0 : index
    %1 = vector.load %arg2[%c0_1, %c0_2] : memref<32x4xf32, #tpu.memory_space<vmem>>, vector<32x4xf32>
    %cst = arith.constant dense<0.000000e+00> : vector<16x4xf32>
    %2 = tpu.matmul %0, %1, %cst {dimension_numbers = #tpu.dot_dimension_numbers<[1], [0], [0], [1], [0, 0, 1, 1], [], []>} : vector<16x32xf32>, vector<32x4xf32>, vector<16x4xf32> -> vector<16x4xf32>
    %c0_3 = arith.constant 0 : index
    %c0_4 = arith.constant 0 : index
    %3 = vector.load %arg3[%c0_3, %c0_4] : memref<1x4xf32, #tpu.memory_space<vmem>>, vector<1x4xf32>
    %4 = vector.broadcast %3 : vector<1x4xf32> to vector<16x4xf32>
    %5 = arith.addf %2, %4 : vector<16x4xf32>
    %6 = math.tanh %5 : vector<16x4xf32>
    %cst_5 = arith.constant 1.600000e+01 : f32
    %7 = vector.broadcast %cst_5 : f32 to vector<16x4xf32>
    %8 = arith.mulf %7, %6 : vector<16x4xf32>
    %9 = math.floor %8 : vector<16x4xf32>
    %10 = tpu.transpose %9, [1, 0] : vector<16x4xf32> -> vector<4x16xf32>
    %c0_6 = arith.constant 0 : index
    %c0_7 = arith.constant 0 : index
    %11 = vector.load %arg9[%c0_6, %c0_7] : memref<4x16xf32, #tpu.memory_space<vmem>>, vector<4x16xf32>
    tpu.vector_store %arg9[%c0_6, %c0_7], %10 {strides = array<i32>} : memref<4x16xf32, #tpu.memory_space<vmem>>, vector<4x16xf32>,
    %c0_8 = arith.constant 0 : index
    %c0_9 = arith.constant 0 : index
    %12 = vector.load %arg4[%c0_8, %c0_9] : memref<4x32xf32, #tpu.memory_space<vmem>>, vector<4x32xf32>
    %cst_10 = arith.constant dense<0.000000e+00> : vector<16x32xf32>
    %13 = tpu.matmul %9, %12, %cst_10 {dimension_numbers = #tpu.dot_dimension_numbers<[1], [0], [0], [1], [0, 0, 1, 1], [], []>} : vector<16x4xf32>, vector<4x32xf32>, vector<16x32xf32> -> vector<16x32xf32>
    %c0_11 = arith.constant 0 : index
    %c0_12 = arith.constant 0 : index
    %14 = vector.load %arg5[%c0_11, %c0_12] : memref<1x32xf32, #tpu.memory_space<vmem>>, vector<1x32xf32>
    %15 = vector.broadcast %14 : vector<1x32xf32> to vector<16x32xf32>
    %16 = arith.addf %13, %15 : vector<16x32xf32>
    %cst_13 = arith.constant 0.000000e+00 : f32
    %17 = vector.broadcast %cst_13 : f32 to vector<16x32xf32>
    %18 = arith.cmpf oge, %16, %17 : vector<16x32xf32>
    %cst_14 = arith.constant 0.00999999977 : f32
    %19 = vector.broadcast %cst_14 : f32 to vector<16x32xf32>
    %20 = arith.mulf %19, %16 : vector<16x32xf32>
    %21 = arith.select %18, %16, %20 : vector<16x32xi1>, vector<16x32xf32>
    %cst_15 = arith.constant dense<0.000000e+00> : vector<16xf32>
    %22 = vector.multi_reduction <add>, %21, %cst_15 [1] : vector<16x32xf32> to vector<16xf32>
    %23 = vector.shape_cast %22 : vector<16xf32> to vector<16x1xf32>
    %cst_16 = arith.constant 3.200000e+01 : f32
    %24 = vector.broadcast %cst_16 : f32 to vector<16x1xf32>
    %25 = arith.divf %23, %24 : vector<16x1xf32>
    %26 = vector.broadcast %25 : vector<16x1xf32> to vector<16x32xf32>
    %27 = arith.subf %21, %26 : vector<16x32xf32>
    %28 = arith.mulf %27, %27 : vector<16x32xf32>
    %cst_17 = arith.constant dense<0.000000e+00> : vector<16xf32>
    %29 = vector.multi_reduction <add>, %28, %cst_17 [1] : vector<16x32xf32> to vector<16xf32>
    %30 = vector.shape_cast %29 : vector<16xf32> to vector<16x1xf32>
    %cst_18 = arith.constant 3.200000e+01 : f32
    %31 = vector.broadcast %cst_18 : f32 to vector<16x1xf32>
    %32 = arith.divf %30, %31 : vector<16x1xf32>
    %cst_19 = arith.constant 9.99999974E-6 : f32
    %33 = vector.broadcast %cst_19 : f32 to vector<16x1xf32>
    %34 = arith.addf %32, %33 : vector<16x1xf32>
    %35 = math.rsqrt %34 : vector<16x1xf32>
    %36 = vector.broadcast %35 : vector<16x1xf32> to vector<16x32xf32>
    %37 = arith.mulf %27, %36 : vector<16x32xf32>
    %c0_20 = arith.constant 0 : index
    %c0_21 = arith.constant 0 : index
    %38 = vector.load %arg6[%c0_20, %c0_21] : memref<1x32xf32, #tpu.memory_space<vmem>>, vector<1x32xf32>
    %39 = vector.broadcast %38 : vector<1x32xf32> to vector<16x32xf32>
    %40 = arith.mulf %37, %39 : vector<16x32xf32>
    %c0_22 = arith.constant 0 : index
    %c0_23 = arith.constant 0 : index
    %41 = vector.load %arg7[%c0_22, %c0_23] : memref<1x32xf32, #tpu.memory_space<vmem>>, vector<1x32xf32>
    %42 = vector.broadcast %41 : vector<1x32xf32> to vector<16x32xf32>
    %43 = arith.addf %40, %42 : vector<16x32xf32>
    %c0_24 = arith.constant 0 : index
    %c0_25 = arith.constant 0 : index
    %44 = vector.load %arg8[%c0_24, %c0_25] : memref<16x32xf32, #tpu.memory_space<vmem>>, vector<16x32xf32>
    tpu.vector_store %arg8[%c0_24, %c0_25], %43 {strides = array<i32>} : memref<16x32xf32, #tpu.memory_space<vmem>>, vector<16x32xf32>,
    return
  }
  func.func @transform_0(%arg0: i32) -> (i32, i32) {
    %c0_i32 = arith.constant 0 : i32
    %c0_i32_0 = arith.constant 0 : i32
    return %arg0, %c0_i32 : i32, i32
  }
  func.func @transform_1(%arg0: i32) -> (i32, i32) {
    %c0_i32 = arith.constant 0 : i32
    %c0_i32_0 = arith.constant 0 : i32
    %c0_i32_1 = arith.constant 0 : i32
    return %c0_i32, %c0_i32_0 : i32, i32
  }
  func.func @transform_2(%arg0: i32) -> (i32, i32) {
    %c0_i32 = arith.constant 0 : i32
    %c0_i32_0 = arith.constant 0 : i32
    %c0_i32_1 = arith.constant 0 : i32
    return %c0_i32, %c0_i32_0 : i32, i32
  }
  func.func @transform_3(%arg0: i32) -> (i32, i32) {
    %c0_i32 = arith.constant 0 : i32
    %c0_i32_0 = arith.constant 0 : i32
    %c0_i32_1 = arith.constant 0 : i32
    return %c0_i32, %c0_i32_0 : i32, i32
  }
  func.func @transform_4(%arg0: i32) -> (i32, i32) {
    %c0_i32 = arith.constant 0 : i32
    %c0_i32_0 = arith.constant 0 : i32
    %c0_i32_1 = arith.constant 0 : i32
    return %c0_i32, %c0_i32_0 : i32, i32
  }
  func.func @transform_5(%arg0: i32) -> (i32, i32) {
    %c0_i32 = arith.constant 0 : i32
    %c0_i32_0 = arith.constant 0 : i32
    %c0_i32_1 = arith.constant 0 : i32
    return %c0_i32, %c0_i32_0 : i32, i32
  }
  func.func @transform_6(%arg0: i32) -> (i32, i32) {
    %c0_i32 = arith.constant 0 : i32
    %c0_i32_0 = arith.constant 0 : i32
    %c0_i32_1 = arith.constant 0 : i32
    return %c0_i32, %c0_i32_0 : i32, i32
  }
  func.func @transform_7(%arg0: i32) -> (i32, i32) {
    %c0_i32 = arith.constant 0 : i32
    %c0_i32_0 = arith.constant 0 : i32
    return %arg0, %c0_i32 : i32, i32
  }
  func.func @transform_8(%arg0: i32) -> (i32, i32) {
    %c0_i32 = arith.constant 0 : i32
    %c0_i32_0 = arith.constant 0 : i32
    return %c0_i32, %arg0 : i32, i32
  }
}

</mosaic_0001>

<llo_original>
// kernel: tpu_custom_call.1
$region0: #{tpu_custom_call.1}
  #allocation0 [shape = 'u32[]', space=smem, size = 0x4, offset = 0x4, fixed_abs, tag = 'smem constant byte address 0x4 - core index']
  #allocation1 [shape = 'u32[72,128]{1,0:T(1,128)}', space=vmem, size = 0x9000, scoped, tag = 'internal scratch']
  %s0 = inlined_call_operand.vmem [shape: f32[16,32], index: 0, kind: input, shape index: {}]
  %s1 = inlined_call_operand.vmem [shape: f32[32,4], index: 1, kind: input, shape index: {}]
  %s2 = inlined_call_operand.vmem [shape: f32[1,4], index: 2, kind: input, shape index: {}]
  %s3 = inlined_call_operand.vmem [shape: f32[4,32], index: 3, kind: input, shape index: {}]
  %s4 = inlined_call_operand.vmem [shape: f32[1,32], index: 4, kind: input, shape index: {}]
  %s5 = inlined_call_operand.vmem [shape: f32[1,32], index: 5, kind: input, shape index: {}]
  %s6 = inlined_call_operand.vmem [shape: f32[1,32], index: 6, kind: input, shape index: {}]
  %s7 = inlined_call_operand.hbm [shape: f32[16,32], index: 7, kind: output, shape index: {0}]
  %s8 = inlined_call_operand.hbm [shape: f32[4,16], index: 8, kind: output, shape index: {1}]
  %9 = xla_tuple %s7, %s8
  %s10 = sld [smem:[#allocation0]]
  $region46: #{tpu_custom_call.1} parent=0
    _
  %s12 = ssub.s32 1, %s10
  %s13 = scalar_select 0, %s12, %s10
  $region1: #{tpu_custom_call.1} parent=0
    #allocation2 [shape = 'u8[8192]{0}', space=vmem, size = 0x2000, scoped, tag = 'output window, operand 0, single buffered']
    #allocation3 [shape = 's32[1]{0}', space=sflag, size = 0x4, scoped, tag = 'scoped memory for tpu_custom_call.1']
    #allocation4 [shape = 'u8[2048]{0}', space=vmem, size = 0x800, scoped, tag = 'output window, operand 1, single buffered']
    #allocation5 [shape = 's32[1]{0}', space=sflag, size = 0x4, scoped, tag = 'scoped memory for tpu_custom_call.1']
    %14 = vsyncpa [#allocation3], 0
    %15 = vsyncpa [#allocation5], 0
    // Predicated region
    $region2: #{tpu_custom_call.1} parent=1 // pred_check
      _
    $region3: #{tpu_custom_call.1} parent=1 // pred_check_branch
      %17 = sbr.rel (0) target = $region5
    $region4: #{tpu_custom_call.1} parent=1 // pred_region
      _
    $region5: #{tpu_custom_call.1} parent=1 // pred_fallthru
      _
    // Predicated region
    $region6: #{tpu_custom_call.1} parent=1 // pred_check
      _
    $region7: #{tpu_custom_call.1} parent=1 // pred_check_branch
      %19 = sbr.rel (0) target = $region9
    $region8: #{tpu_custom_call.1} parent=1 // pred_region
      _
    $region9: #{tpu_custom_call.1} parent=1 // pred_fallthru
      _
    // Predicated region
    $region10: #{tpu_custom_call.1} parent=1 // pred_check
      _
    $region11: #{tpu_custom_call.1} parent=1 // pred_check_branch
      %21 = sbr.rel (0) target = $region13
    $region12: #{tpu_custom_call.1} parent=1 // pred_region
      _
    $region13: #{tpu_custom_call.1} parent=1 // pred_fallthru
      _
    // Predicated region
    $region14: #{tpu_custom_call.1} parent=1 // pred_check
      _
    $region15: #{tpu_custom_call.1} parent=1 // pred_check_branch
      %23 = sbr.rel (0) target = $region17
    $region16: #{tpu_custom_call.1} parent=1 // pred_region
      _
    $region17: #{tpu_custom_call.1} parent=1 // pred_fallthru
      _
    // Predicated region
    $region18: #{tpu_custom_call.1} parent=1 // pred_check
      _
    $region19: #{tpu_custom_call.1} parent=1 // pred_check_branch
      %25 = sbr.rel (0) target = $region21
    $region20: #{tpu_custom_call.1} parent=1 // pred_region
      _
    $region21: #{tpu_custom_call.1} parent=1 // pred_fallthru
      _
    // Predicated region
    $region22: #{tpu_custom_call.1} parent=1 // pred_check
      _
    $region23: #{tpu_custom_call.1} parent=1 // pred_check_branch
      %27 = sbr.rel (0) target = $region25
    $region24: #{tpu_custom_call.1} parent=1 // pred_region
      _
    $region25: #{tpu_custom_call.1} parent=1 // pred_fallthru
      _
    // Predicated region
    $region26: #{tpu_custom_call.1} parent=1 // pred_check
      _
    $region27: #{tpu_custom_call.1} parent=1 // pred_check_branch
      %29 = sbr.rel (0) target = $region29
    $region28: #{tpu_custom_call.1} parent=1 // pred_region
      _
    $region29: #{tpu_custom_call.1} parent=1 // pred_fallthru
      _
    %v30 = vld [vmem:[%s0] sm:$0xff]
    %v31 = vld [vmem:[%s0 + $0x8] sm:$0xff]
    %v32 = vld [vmem:[%s1] sm:$0xff]
    %v33 = vld [vmem:[%s1 + $0x8] sm:$0xff]
    %v34 = vld [vmem:[%s1 + $0x10] sm:$0xff]
    %v35 = vld [vmem:[%s1 + $0x18] sm:$0xff]
    %v36 = vld [vmem:[%s2] sm:$0x1]
    %v38 = vperm.slane %v36, 0
    %vm40 = vcmask 261120
    %v42 = vsel %vm40, %v30, 0
    %v45 = vsel %vm40, %v31, 0
    %47 = vmatpush.msra.mxu0 0.0
    %48 = vmatpush.msra.mxu0 0.0
    %49 = vmatpush.msra.mxu0 0.0
    %50 = vmatpush.msra.mxu0 0.0
    %51 = vmatpush.msra.mxu0 0.0
    %52 = vmatpush.msra.mxu0 0.0
    %53 = vmatpush.msra.mxu0 0.0
    %54 = vmatpush.msra.mxu0 0.0
    %55 = vmatpush.msra.mxu0 0.0
    %56 = vmatpush.msra.mxu0 0.0
    %57 = vmatpush.msra.mxu0 0.0
    %58 = vmatpush.msra.mxu0 0.0
    %59 = vmatpush.msra.mxu0 %v35
    %60 = vmatpush.msra.mxu0 %v34
    %61 = vmatpush.msra.mxu0 %v33
    %62 = vmatpush.msra.mxu0 %v32
    %63 = vmatmul.f32.gmra.mxu0 %v42
    %v64 = vpop.f32.mrf.mxu0
    %v65 = vadd.f32 %v38, %v64
    %66 = vmatmul.f32.gmra.mxu0 %v45
    %v67 = vpop.f32.mrf.mxu0
    %v68 = vadd.f32 %v38, %v67
    %69 = vdwg.mxu0
    %v70 = vtanh.pop %v65
    %v71 = vtanh.pop %v68
    %v72 = vmul.f32 %v70, 16.0
    %v73 = vmul.f32 %v71, 16.0
    %v74 = vfloor.f32 %v72
    %v75 = vfloor.f32 %v73
    %76 = vxpose.xlu0.b32.start [1/16] %v74, 128
    %77 = vxpose.xlu0.b32.cont [2/16] %v75, 128
    %78 = vxpose.xlu0.b32.cont [3/16] 0.0, 128
    %79 = vxpose.xlu0.b32.cont [4/16] 0.0, 128
    %80 = vxpose.xlu0.b32.cont [5/16] 0.0, 128
    %81 = vxpose.xlu0.b32.cont [6/16] 0.0, 128
    %82 = vxpose.xlu0.b32.cont [7/16] 0.0, 128
    %83 = vxpose.xlu0.b32.cont [8/16] 0.0, 128
    %84 = vxpose.xlu0.b32.cont [9/16] 0.0, 128
    %85 = vxpose.xlu0.b32.cont [10/16] 0.0, 128
    %86 = vxpose.xlu0.b32.cont [11/16] 0.0, 128
    %87 = vxpose.xlu0.b32.cont [12/16] 0.0, 128
    %88 = vxpose.xlu0.b32.cont [13/16] 0.0, 128
    %89 = vxpose.xlu0.b32.cont [14/16] 0.0, 128
    %90 = vxpose.xlu0.b32.cont [15/16] 0.0, 128
    %91 = vxpose.xlu0.b32.end [16/16] 0.0, 128
    %v92 = vpop.trf.xlu0
    %v93 = vpop.trf.xlu0
    %v94 = vpop.trf.xlu0
    %v95 = vpop.trf.xlu0
    %v96 = vpop.trf.xlu0
    %v97 = vpop.trf.xlu0
    %v98 = vpop.trf.xlu0
    %v99 = vpop.trf.xlu0
    %v100 = vpop.trf.xlu0
    %v101 = vpop.trf.xlu0
    %v102 = vpop.trf.xlu0
    %v103 = vpop.trf.xlu0
    %v104 = vpop.trf.xlu0
    %v105 = vpop.trf.xlu0
    %v106 = vpop.trf.xlu0
    %v107 = vpop.trf.xlu0
    %vm108 = vcmask 125952
    %109 = vst.msk [vmem:[#allocation4] sm:$0xf] %vm108, %v92
    %v110 = vld [vmem:[%s3] sm:$0xf]
    %v111 = vld [vmem:[%s4] sm:$0x1]
    %v113 = vperm.slane %v111, 0
    %vm115 = vcmask 31744
    %v117 = vsel %vm115, %v74, 0
    %v120 = vsel %vm115, %v75, 0
    %vm122 = vcmask 1043456
    %v124 = vsel %vm122, %v110, 0
    %126 = vmatpush.msra.mxu0 0.0
    %127 = vmatpush.msra.mxu0 0.0
    %128 = vmatpush.msra.mxu0 0.0
    %129 = vmatpush.msra.mxu0 0.0
    %130 = vmatpush.msra.mxu0 0.0
    %131 = vmatpush.msra.mxu0 0.0
    %132 = vmatpush.msra.mxu0 0.0
    %133 = vmatpush.msra.mxu0 0.0
    %134 = vmatpush.msra.mxu0 0.0
    %135 = vmatpush.msra.mxu0 0.0
    %136 = vmatpush.msra.mxu0 0.0
    %137 = vmatpush.msra.mxu0 0.0
    %138 = vmatpush.msra.mxu0 0.0
    %139 = vmatpush.msra.mxu0 0.0
    %140 = vmatpush.msra.mxu0 0.0
    %141 = vmatpush.msra.mxu0 %v124
    %142 = vmatmul.f32.gmra.mxu0 %v117
    %v143 = vpop.f32.mrf.mxu0
    %v144 = vadd.f32 %v113, %v143
    %145 = vmatmul.f32.gmra.mxu0 %v120
    %v146 = vpop.f32.mrf.mxu0
    %v147 = vadd.f32 %v113, %v146
    %148 = vdwg.mxu0
    %vm149 = vcmp.ge.f32.partialorder %v144, 0.0
    %vm150 = vcmp.ge.f32.partialorder %v147, 0.0
    %v151 = vmul.f32 %v144, 0.01
    %v152 = vmul.f32 %v147, 0.01
    %v153 = vsel %vm149, %v144, %v151
    %v154 = vsel %vm150, %v147, %v152
    %v155 = vsel %vm40, %v153, 0.0
    %156 = vadd.xlane.f32.xlu0 %v155
    %v157 = vpop.xlane.xlu0 %156
    %v158 = vsel %vm40, %v154, 0.0
    %159 = vadd.xlane.f32.xlu0 %v158
    %v160 = vpop.xlane.xlu0 %159
    %v161 = vrcp.pop 32.0
    %v162 = vmul.f32 32.0, %v161
    %v163 = vsub.f32 1.0, %v162
    %v164 = vmul.f32 %v161, %v163
    %v165 = vadd.f32 %v161, %v164
    %vm166 = vweird.f32 %v161
    %v167 = vsel %vm166, %v161, %v165
    %v168 = vmul.f32 %v157, %v167
    %v169 = vmul.f32 %v160, %v167
    %v170 = vsub.f32 %v153, %v168
    %v171 = vsub.f32 %v154, %v169
    %v172 = vmul.f32 %v170, %v170
    %v173 = vmul.f32 %v171, %v171
    %v174 = vsel %vm40, %v172, 0.0
    %175 = vadd.xlane.f32.xlu0 %v174
    %v176 = vpop.xlane.xlu0 %175
    %v177 = vsel %vm40, %v173, 0.0
    %178 = vadd.xlane.f32.xlu0 %v177
    %v179 = vpop.xlane.xlu0 %178
    %v180 = vmul.f32 %v176, %v167
    %v181 = vmul.f32 %v179, %v167
    %v182 = vadd.f32 %v180, 1e-05
    %v183 = vadd.f32 %v181, 1e-05
    %v184 = vrsqrt.pop %v182
    %v185 = vmul.f32 %v184, %v182
    %v186 = vmul.f32 %v185, %v184
    %v187 = vmul.f32 0.5, %v186
    %v188 = vsub.f32 1.5, %v187
    %v189 = vmul.f32 %v184, %v188
    %vm190 = vweird.f32 %v182
    %vm191 = vweird.f32 %v184
    %vm192 = vmor %vm190, %vm191
    %v193 = vsel %vm192, %v184, %v189
    %v194 = vrsqrt.pop %v183
    %v195 = vmul.f32 %v194, %v183
    %v196 = vmul.f32 %v195, %v194
    %v197 = vmul.f32 0.5, %v196
    %v198 = vsub.f32 1.5, %v197
    %v199 = vmul.f32 %v194, %v198
    %vm200 = vweird.f32 %v183
    %vm201 = vweird.f32 %v194
    %vm202 = vmor %vm200, %vm201
    %v203 = vsel %vm202, %v194, %v199
    %v204 = vmul.f32 %v170, %v193
    %v205 = vmul.f32 %v171, %v203
    %v206 = vld [vmem:[%s5] sm:$0x1]
    %v208 = vperm.slane %v206, 0
    %v210 = vmul.f32 %v204, %v208
    %v211 = vmul.f32 %v205, %v208
    %v212 = vld [vmem:[%s6] sm:$0x1]
    %v214 = vperm.slane %v212, 0
    %v216 = vadd.f32 %v210, %v214
    %v217 = vadd.f32 %v211, %v214
    %218 = vst.msk [vmem:[#allocation2] sm:$0xff] %vm40, %v216
    %219 = vst.msk [vmem:[#allocation2 + $0x8] sm:$0xff] %vm40, %v217
    // Predicated region
    $region30: #{tpu_custom_call.1} parent=1 // pred_check
      _
    $region31: #{tpu_custom_call.1} parent=1 // pred_check_branch
      %221 = sbr.rel (0) target = $region33
    $region32: #{tpu_custom_call.1} parent=1 // pred_region
      %223 = vsyncadd [#allocation3], 0
      %s224 = sshll.u32 [#allocation2], 4
      %s225 = int_to_ptr.vmem [resolvable:$true] %s224
      %s226 = sshll.u32 %s7, 4
      %s227 = int_to_ptr.hbm [resolvable:$true] %s226
      %232 = dma.vmem_to_hbm [thread:$0]  %s225, 256, %s227, [#allocation3], 128, 128, 8
    $region33: #{tpu_custom_call.1} parent=1 // pred_fallthru
      _
    // Predicated region
    $region34: #{tpu_custom_call.1} parent=1 // pred_check
      _
    $region35: #{tpu_custom_call.1} parent=1 // pred_check_branch
      %234 = sbr.rel (0) target = $region37
    $region36: #{tpu_custom_call.1} parent=1 // pred_region
      %236 = vsyncadd [#allocation5], 0
      %s238 = sshll.u32 [#allocation4], 4
      %s239 = int_to_ptr.vmem [resolvable:$true] %s238
      %s240 = sshll.u32 %s8, 4
      %s241 = int_to_ptr.hbm [resolvable:$true] %s240
      %243 = dma.vmem_to_hbm [thread:$0]  %s239, 64, %s241, [#allocation5]
    $region37: #{tpu_custom_call.1} parent=1 // pred_fallthru
      _
    // Predicated region
    $region38: #{tpu_custom_call.1} parent=1 // pred_check
      _
    $region39: #{tpu_custom_call.1} parent=1 // pred_check_branch
      %245 = sbr.rel (0) target = $region41
    $region40: #{tpu_custom_call.1} parent=1 // pred_region
      %247 = dma.done [#allocation3], 256
    $region41: #{tpu_custom_call.1} parent=1 // pred_fallthru
      _
    // Predicated region
    $region42: #{tpu_custom_call.1} parent=1 // pred_check
      _
    $region43: #{tpu_custom_call.1} parent=1 // pred_check_branch
      %249 = sbr.rel (0) target = $region45
    $region44: #{tpu_custom_call.1} parent=1 // pred_region
      %251 = dma.done [#allocation5], 64
    $region45: #{tpu_custom_call.1} parent=1 // pred_fallthru
      _
    %252 = vsyncpa [#allocation3], 1
    %253 = vsyncpa [#allocation5], 1

</llo_original>
